<compile_context>
chip_gen: v7x
topology: tpu7x:2x2x1
jax: 0.10.0
libtpu: 0.0.40
codegen_flags: <defaults>
</compile_context>

<pallas_src>
import math

import jax
import jax.numpy as jnp
from jax.experimental import pallas as pl
from jax.experimental.pallas import tpu as pltpu

HIDDEN = 128
OUT_PAD_MULT = 128  # lane-dense output width


def _round_up(x, m):
    return ((x + m - 1) // m) * m


def _num_tensorcores():
    """Best-effort TC-per-device count (v7x has 2); fall back to 1."""
    try:
        kind = jax.devices()[0].device_kind.lower()
        if "v7" in kind:
            return 2
    except Exception:
        pass
    return 1


def duel_dqn_kernel(x_ref, w1_ref, b1_ref, wq_ref, bq_ref, q_ref):
    # h = relu(x @ W1 + b1)                                  [tb, 128]
    h = jnp.dot(x_ref[...], w1_ref[...], preferred_element_type=jnp.float32)
    h = jnp.maximum(h + b1_ref[...], 0.0)
    # q = h @ Wq + bq   (dueling head pre-folded; Wq/bq zero-padded to 128 cols)
    q = jnp.dot(h, wq_ref[...], preferred_element_type=jnp.float32) + bq_ref[...]
    q_ref[...] = q.astype(q_ref.dtype)  # lane-dense (tb, 128) store


def duel_dqn_forward(x, params, *, max_tb=4096):
    """x: [B, num_inputs] float32; params: dict with pre-transposed/folded/padded weights."""
    b, num_inputs = x.shape
    num_outputs = int(params["num_outputs"])
    out_pad = params["wq"].shape[1]  # 128 (lane-dense)

    # --- batch tiling: 8-row granularity, as few grid steps as possible -------
    num_tc = _num_tensorcores()
    b8 = _round_up(b, 8)
    if num_tc > 1 and b8 >= 16:
        tb = _round_up(pl.cdiv(b8, num_tc), 8)   # exactly num_tc tiles on v7x
    else:
        tb = b8                                   # grid=(1,) on v5e/v6e
    tb = max(8, min(tb, max_tb))
    b_pad = _round_up(b8, tb)
    if b_pad != b:
        x = jnp.pad(x, ((0, b_pad - b), (0, 0)))
    grid = (b_pad // tb,)

    q = pl.pallas_call(
        duel_dqn_kernel,
        out_shape=jax.ShapeDtypeStruct((b_pad, out_pad), jnp.float32),
        grid_spec=pltpu.PrefetchScalarGridSpec(
            num_scalar_prefetch=0,
            grid=grid,
            in_specs=[
                # x streams one batch tile per grid step.
                pl.BlockSpec((tb, num_inputs), lambda i: (i, 0)),
                # Weights/biases: constant block index -> resident in VMEM.
                pl.BlockSpec((num_inputs, HIDDEN), lambda i: (0, 0)),
                pl.BlockSpec((1, HIDDEN), lambda i: (0, 0)),
                pl.BlockSpec((HIDDEN, out_pad), lambda i: (0, 0)),
                pl.BlockSpec((1, out_pad), lambda i: (0, 0)),
            ],
            out_specs=pl.BlockSpec((tb, out_pad), lambda i: (i, 0)),
        ),
        compiler_params=pltpu.CompilerParams(
            dimension_semantics=("parallel",),  # independent batch tiles (2 TCs on v7x)
        ),
    )(x, params["w1"], params["b1"], params["wq"], params["bq"])
    return q[:b, :num_outputs]


def xavier_uniform(key, shape_out_in):
    fan_out, fan_in = shape_out_in
    limit = math.sqrt(6.0 / (fan_in + fan_out))
    return jax.random.uniform(key, shape_out_in, jnp.float32, -limit, limit)


def linear_bias(key, fan_in, n_out):
    # torch.nn.Linear default bias init: U(-1/sqrt(fan_in), 1/sqrt(fan_in))
    bound = 1.0 / math.sqrt(fan_in)
    return jax.random.uniform(key, (n_out,), jnp.float32, -bound, bound)


def init_params(key, num_inputs, num_outputs):
    k1, k2, k3, k4, k5, k6 = jax.random.split(key, 6)
    w_fc = xavier_uniform(k1, (HIDDEN, num_inputs))          # torch layout [out, in]
    w_adv = xavier_uniform(k2, (num_outputs, HIDDEN))
    w_val = xavier_uniform(k3, (1, HIDDEN))
    b_fc = linear_bias(k4, num_inputs, HIDDEN)
    b_adv = linear_bias(k5, HIDDEN, num_outputs)
    b_val = linear_bias(k6, HIDDEN, 1)

    # Pre-transpose to [in, out]; biases as [1, out] rows.
    wa = w_adv.T                      # [128, A]
    wv = w_val.T                      # [128, 1]
    ba = b_adv.reshape(1, num_outputs)
    bv = b_val.reshape(1, 1)

    # Fold the dueling head into a single output matmul:
    #   q = h@wv + bv + (h@wa + ba) - mean(h@wa + ba, axis=1)
    #     = h @ (wv + wa - mean(wa, axis=1)) + (bv + ba - mean(ba))
    wq = wv + (wa - jnp.mean(wa, axis=1, keepdims=True))      # [128, A]
    bq = bv + (ba - jnp.mean(ba, axis=1, keepdims=True))      # [1, A]

    # Lane-dense padding of the output head: 128 columns, extras are zero.
    out_pad = _round_up(max(num_outputs, 1), OUT_PAD_MULT)
    wq_p = jnp.zeros((HIDDEN, out_pad), jnp.float32).at[:, :num_outputs].set(wq)
    bq_p = jnp.zeros((1, out_pad), jnp.float32).at[:, :num_outputs].set(bq)

    return {
        "num_outputs": num_outputs,
        "w1": w_fc.T,                    # [num_inputs, 128]
        "b1": b_fc.reshape(1, HIDDEN),   # [1, 128]
        "wq": wq_p, "bq": bq_p,          # folded + lane-dense-padded head (kernel)
        "wa": wa, "ba": ba,              # unfolded copies kept for the reference check
        "wv": wv, "bv": bv,
    }


def reference_forward(x, params):
    """Unfused reference matching the original PyTorch forward exactly."""
    h = jnp.maximum(x @ params["w1"] + params["b1"], 0.0)
    adv = h @ params["wa"] + params["ba"]
    val = h @ params["wv"] + params["bv"]
    return val + (adv - jnp.mean(adv, axis=1, keepdims=True))


if __name__ == "__main__":
    num_inputs, num_outputs = 4, 2            # CartPole: 4 obs dims, 2 actions
    key = jax.random.PRNGKey(0)
    kx, kp, kx2 = jax.random.split(key, 3)
    params = init_params(kp, num_inputs, num_outputs)

    # Batched call (replay-buffer sized): grid collapses to 1 step (2 on v7x).
    batch = 256
    x = jax.random.normal(kx, (batch, num_inputs), jnp.float32)
    q = jax.block_until_ready(duel_dqn_forward(x, params))
    q_ref = reference_forward(x, params)
    assert q.shape == (batch, num_outputs)
    assert jnp.allclose(q, q_ref, atol=1e-4, rtol=1e-4), (q, q_ref)

    # Small ragged batch exercises the 8-row padding path (action selection).
    x2 = jax.random.normal(kx2, (3, num_inputs), jnp.float32)
    q2 = jax.block_until_ready(duel_dqn_forward(x2, params))
    q2_ref = reference_forward(x2, params)
    assert q2.shape == (3, num_outputs)
    assert jnp.allclose(q2, q2_ref, atol=1e-4, rtol=1e-4), (q2, q2_ref)

    print("KERNEL_OK")
</pallas_src>

<mosaic_0001>
module attributes {stable_mosaic.version = 11 : i64} {
  func.func @duel_dqn_kernel(%arg0: i32, %arg1: memref<256x4xf32, #tpu.memory_space<vmem>>, %arg2: memref<4x128xf32, #tpu.memory_space<vmem>>, %arg3: memref<1x128xf32, #tpu.memory_space<vmem>>, %arg4: memref<128x128xf32, #tpu.memory_space<vmem>>, %arg5: memref<1x128xf32, #tpu.memory_space<vmem>>, %arg6: memref<256x128xf32, #tpu.memory_space<vmem>>) attributes {dimension_semantics = [#tpu.dimension_semantics<parallel>], iteration_bounds = array<i64: 1>, scalar_prefetch = 0 : i64, scratch_operands = 0 : i64, tpu.core_type = #tpu.core_type<tc>, window_params = [{transform_indices = @transform_0, window_bounds = array<i64: 256, 4>}, {pipeline_mode = #tpu.pipeline_mode<synchronous>, transform_indices = @transform_1, window_bounds = array<i64: 4, 128>}, {pipeline_mode = #tpu.pipeline_mode<synchronous>, transform_indices = @transform_2, window_bounds = array<i64: 1, 128>}, {pipeline_mode = #tpu.pipeline_mode<synchronous>, transform_indices = @transform_3, window_bounds = array<i64: 128, 128>}, {pipeline_mode = #tpu.pipeline_mode<synchronous>, transform_indices = @transform_4, window_bounds = array<i64: 1, 128>}, {transform_indices = @transform_5, window_bounds = array<i64: 256, 128>}]} {
    %c0 = arith.constant 0 : index
    %c0_0 = arith.constant 0 : index
    %0 = vector.load %arg1[%c0, %c0_0] : memref<256x4xf32, #tpu.memory_space<vmem>>, vector<256x4xf32>
    %c0_1 = arith.constant 0 : index
    %c0_2 = arith.constant 0 : index
    %1 = vector.load %arg2[%c0_1, %c0_2] : memref<4x128xf32, #tpu.memory_space<vmem>>, vector<4x128xf32>
    %cst = arith.constant dense<0.000000e+00> : vector<256x128xf32>
    %2 = tpu.matmul %0, %1, %cst {dimension_numbers = #tpu.dot_dimension_numbers<[1], [0], [0], [1], [0, 0, 1, 1], [], []>} : vector<256x4xf32>, vector<4x128xf32>, vector<256x128xf32> -> vector<256x128xf32>
    %c0_3 = arith.constant 0 : index
    %c0_4 = arith.constant 0 : index
    %3 = vector.load %arg3[%c0_3, %c0_4] : memref<1x128xf32, #tpu.memory_space<vmem>>, vector<1x128xf32>
    %4 = vector.broadcast %3 : vector<1x128xf32> to vector<256x128xf32>
    %5 = arith.addf %2, %4 : vector<256x128xf32>
    %cst_5 = arith.constant 0.000000e+00 : f32
    %6 = vector.broadcast %cst_5 : f32 to vector<256x128xf32>
    %7 = arith.maximumf %5, %6 : vector<256x128xf32>
    %c0_6 = arith.constant 0 : index
    %c0_7 = arith.constant 0 : index
    %8 = vector.load %arg4[%c0_6, %c0_7] : memref<128x128xf32, #tpu.memory_space<vmem>>, vector<128x128xf32>
    %cst_8 = arith.constant dense<0.000000e+00> : vector<256x128xf32>
    %9 = tpu.matmul %7, %8, %cst_8 {dimension_numbers = #tpu.dot_dimension_numbers<[1], [0], [0], [1], [0, 0, 1, 1], [], []>} : vector<256x128xf32>, vector<128x128xf32>, vector<256x128xf32> -> vector<256x128xf32>
    %c0_9 = arith.constant 0 : index
    %c0_10 = arith.constant 0 : index
    %10 = vector.load %arg5[%c0_9, %c0_10] : memref<1x128xf32, #tpu.memory_space<vmem>>, vector<1x128xf32>
    %11 = vector.broadcast %10 : vector<1x128xf32> to vector<256x128xf32>
    %12 = arith.addf %9, %11 : vector<256x128xf32>
    %c0_11 = arith.constant 0 : index
    %c0_12 = arith.constant 0 : index
    %13 = vector.load %arg6[%c0_11, %c0_12] : memref<256x128xf32, #tpu.memory_space<vmem>>, vector<256x128xf32>
    tpu.vector_store %arg6[%c0_11, %c0_12], %12 {strides = array<i32>} : memref<256x128xf32, #tpu.memory_space<vmem>>, vector<256x128xf32>,
    return
  }
  func.func @transform_0(%arg0: i32) -> (i32, i32) {
    %c0_i32 = arith.constant 0 : i32
    %c0_i32_0 = arith.constant 0 : i32
    return %arg0, %c0_i32 : i32, i32
  }
  func.func @transform_1(%arg0: i32) -> (i32, i32) {
    %c0_i32 = arith.constant 0 : i32
    %c0_i32_0 = arith.constant 0 : i32
    %c0_i32_1 = arith.constant 0 : i32
    return %c0_i32, %c0_i32_0 : i32, i32
  }
  func.func @transform_2(%arg0: i32) -> (i32, i32) {
    %c0_i32 = arith.constant 0 : i32
    %c0_i32_0 = arith.constant 0 : i32
    %c0_i32_1 = arith.constant 0 : i32
    return %c0_i32, %c0_i32_0 : i32, i32
  }
  func.func @transform_3(%arg0: i32) -> (i32, i32) {
    %c0_i32 = arith.constant 0 : i32
    %c0_i32_0 = arith.constant 0 : i32
    %c0_i32_1 = arith.constant 0 : i32
    return %c0_i32, %c0_i32_0 : i32, i32
  }
  func.func @transform_4(%arg0: i32) -> (i32, i32) {
    %c0_i32 = arith.constant 0 : i32
    %c0_i32_0 = arith.constant 0 : i32
    %c0_i32_1 = arith.constant 0 : i32
    return %c0_i32, %c0_i32_0 : i32, i32
  }
  func.func @transform_5(%arg0: i32) -> (i32, i32) {
    %c0_i32 = arith.constant 0 : i32
    %c0_i32_0 = arith.constant 0 : i32
    return %arg0, %c0_i32 : i32, i32
  }
}

</mosaic_0001>

<llo_original>
// kernel: tpu_custom_call.1
$region0: #{tpu_custom_call.1}
  #allocation0 [shape = 'u32[]', space=smem, size = 0x4, offset = 0x4, fixed_abs, tag = 'smem constant byte address 0x4 - core index']
  #allocation1 [shape = 'u32[144,128]{1,0:T(1,128)}', space=vmem, size = 0x12000, scoped, tag = 'internal scratch']
  %s0 = inlined_call_operand.vmem [shape: f32[256,4], index: 0, kind: input, shape index: {}]
  %s1 = inlined_call_operand.vmem [shape: f32[4,128], index: 1, kind: input, shape index: {}]
  %s2 = inlined_call_operand.vmem [shape: f32[1,128], index: 2, kind: input, shape index: {}]
  %s3 = inlined_call_operand.vmem [shape: f32[128,128], index: 3, kind: input, shape index: {}]
  %s4 = inlined_call_operand.vmem [shape: f32[1,128], index: 4, kind: input, shape index: {}]
  %s5 = inlined_call_operand.hbm [shape: f32[256,128], index: 5, kind: output, shape index: {}]
  %s6 = sld [smem:[#allocation0]]
  $region30: #{tpu_custom_call.1} parent=0
    _
  %s8 = ssub.s32 1, %s6
  %s9 = scalar_select 0, %s8, %s6
  $region1: #{tpu_custom_call.1} parent=0
    #allocation2 [shape = 'u8[131072]{0}', space=vmem, size = 0x20000, scoped, tag = 'output window, operand 0, single buffered']
    #allocation3 [shape = 's32[1]{0}', space=sflag, size = 0x4, scoped, tag = 'scoped memory for tpu_custom_call.1']
    %10 = vsyncpa [#allocation3], 0
    // Predicated region
    $region2: #{tpu_custom_call.1} parent=1 // pred_check
      _
    $region3: #{tpu_custom_call.1} parent=1 // pred_check_branch
      %12 = sbr.rel (0) target = $region5
    $region4: #{tpu_custom_call.1} parent=1 // pred_region
      _
    $region5: #{tpu_custom_call.1} parent=1 // pred_fallthru
      _
    // Predicated region
    $region6: #{tpu_custom_call.1} parent=1 // pred_check
      _
    $region7: #{tpu_custom_call.1} parent=1 // pred_check_branch
      %14 = sbr.rel (0) target = $region9
    $region8: #{tpu_custom_call.1} parent=1 // pred_region
      _
    $region9: #{tpu_custom_call.1} parent=1 // pred_fallthru
      _
    // Predicated region
    $region10: #{tpu_custom_call.1} parent=1 // pred_check
      _
    $region11: #{tpu_custom_call.1} parent=1 // pred_check_branch
      %16 = sbr.rel (0) target = $region13
    $region12: #{tpu_custom_call.1} parent=1 // pred_region
      _
    $region13: #{tpu_custom_call.1} parent=1 // pred_fallthru
      _
    // Predicated region
    $region14: #{tpu_custom_call.1} parent=1 // pred_check
      _
    $region15: #{tpu_custom_call.1} parent=1 // pred_check_branch
      %18 = sbr.rel (0) target = $region17
    $region16: #{tpu_custom_call.1} parent=1 // pred_region
      _
    $region17: #{tpu_custom_call.1} parent=1 // pred_fallthru
      _
    // Predicated region
    $region18: #{tpu_custom_call.1} parent=1 // pred_check
      _
    $region19: #{tpu_custom_call.1} parent=1 // pred_check_branch
      %20 = sbr.rel (0) target = $region21
    $region20: #{tpu_custom_call.1} parent=1 // pred_region
      _
    $region21: #{tpu_custom_call.1} parent=1 // pred_fallthru
      _
    %v21 = vld [vmem:[%s0] sm:$0xff]
    %v22 = vld [vmem:[%s0 + $0x8] sm:$0xff]
    %v23 = vld [vmem:[%s0 + $0x10] sm:$0xff]
    %v24 = vld [vmem:[%s0 + $0x18] sm:$0xff]
    %v25 = vld [vmem:[%s0 + $0x20] sm:$0xff]
    %v26 = vld [vmem:[%s0 + $0x28] sm:$0xff]
    %v27 = vld [vmem:[%s0 + $0x30] sm:$0xff]
    %v28 = vld [vmem:[%s0 + $0x38] sm:$0xff]
    %v29 = vld [vmem:[%s0 + $0x40] sm:$0xff]
    %v30 = vld [vmem:[%s0 + $0x48] sm:$0xff]
    %v31 = vld [vmem:[%s0 + $0x50] sm:$0xff]
    %v32 = vld [vmem:[%s0 + $0x58] sm:$0xff]
    %v33 = vld [vmem:[%s0 + $0x60] sm:$0xff]
    %v34 = vld [vmem:[%s0 + $0x68] sm:$0xff]
    %v35 = vld [vmem:[%s0 + $0x70] sm:$0xff]
    %v36 = vld [vmem:[%s0 + $0x78] sm:$0xff]
    %v37 = vld [vmem:[%s0 + $0x80] sm:$0xff]
    %v38 = vld [vmem:[%s0 + $0x88] sm:$0xff]
    %v39 = vld [vmem:[%s0 + $0x90] sm:$0xff]
    %v40 = vld [vmem:[%s0 + $0x98] sm:$0xff]
    %v41 = vld [vmem:[%s0 + $0xa0] sm:$0xff]
    %v42 = vld [vmem:[%s0 + $0xa8] sm:$0xff]
    %v43 = vld [vmem:[%s0 + $0xb0] sm:$0xff]
    %v44 = vld [vmem:[%s0 + $0xb8] sm:$0xff]
    %v45 = vld [vmem:[%s0 + $0xc0] sm:$0xff]
    %v46 = vld [vmem:[%s0 + $0xc8] sm:$0xff]
    %v47 = vld [vmem:[%s0 + $0xd0] sm:$0xff]
    %v48 = vld [vmem:[%s0 + $0xd8] sm:$0xff]
    %v49 = vld [vmem:[%s0 + $0xe0] sm:$0xff]
    %v50 = vld [vmem:[%s0 + $0xe8] sm:$0xff]
    %v51 = vld [vmem:[%s0 + $0xf0] sm:$0xff]
    %v52 = vld [vmem:[%s0 + $0xf8] sm:$0xff]
    %v53 = vld [vmem:[%s1] sm:$0xf]
    %v54 = vld [vmem:[%s2] sm:$0x1]
    %v56 = vlaneseq
    %v57 = vshrl.u32 %v56, 7
    %v58 = vsub.s32 0, %v57
    %v59 = vrot.slane %v54, %v58
    %vm61 = vcmask 31744
    %v63 = vsel %vm61, %v21, 0
    %v66 = vsel %vm61, %v22, 0
    %v69 = vsel %vm61, %v23, 0
    %v72 = vsel %vm61, %v24, 0
    %v75 = vsel %vm61, %v25, 0
    %v78 = vsel %vm61, %v26, 0
    %v81 = vsel %vm61, %v27, 0
    %v84 = vsel %vm61, %v28, 0
    %v87 = vsel %vm61, %v29, 0
    %v90 = vsel %vm61, %v30, 0
    %v93 = vsel %vm61, %v31, 0
    %v96 = vsel %vm61, %v32, 0
    %v99 = vsel %vm61, %v33, 0
    %v102 = vsel %vm61, %v34, 0
    %v105 = vsel %vm61, %v35, 0
    %v108 = vsel %vm61, %v36, 0
    %v111 = vsel %vm61, %v37, 0
    %v114 = vsel %vm61, %v38, 0
    %v117 = vsel %vm61, %v39, 0
    %v120 = vsel %vm61, %v40, 0
    %v123 = vsel %vm61, %v41, 0
    %v126 = vsel %vm61, %v42, 0
    %v129 = vsel %vm61, %v43, 0
    %v132 = vsel %vm61, %v44, 0
    %v135 = vsel %vm61, %v45, 0
    %v138 = vsel %vm61, %v46, 0
    %v141 = vsel %vm61, %v47, 0
    %v144 = vsel %vm61, %v48, 0
    %v147 = vsel %vm61, %v49, 0
    %v150 = vsel %vm61, %v50, 0
    %v153 = vsel %vm61, %v51, 0
    %v156 = vsel %vm61, %v52, 0
    %vm158 = vcmask 1043456
    %v160 = vsel %vm158, %v53, 0
    %162 = vmatprep.subr.mxu0 0.0
    %163 = vmatpush1.msra.mxu0 %v160
    %164 = vmatprep.subr.mxu0 0.0
    %165 = vmatpush1.msra.mxu0 0.0
    %166 = vmatprep.subr.mxu0 0.0
    %167 = vmatpush1.msra.mxu0 0.0
    %168 = vmatprep.subr.mxu0 0.0
    %169 = vmatpush1.msra.mxu0 0.0
    %170 = vmatprep.subr.mxu0 0.0
    %171 = vmatpush1.msra.mxu0 0.0
    %172 = vmatprep.subr.mxu0 0.0
    %173 = vmatpush1.msra.mxu0 0.0
    %174 = vmatprep.subr.mxu0 0.0
    %175 = vmatpush1.msra.mxu0 0.0
    %176 = vmatprep.subr.mxu0 0.0
    %177 = vmatpush1.msra.mxu0 0.0
    %178 = vmatprep.subr.mxu0 0.0
    %179 = vmatpush1.msra.mxu0 0.0
    %180 = vmatprep.subr.mxu0 0.0
    %181 = vmatpush1.msra.mxu0 0.0
    %182 = vmatprep.subr.mxu0 0.0
    %183 = vmatpush1.msra.mxu0 0.0
    %184 = vmatprep.subr.mxu0 0.0
    %185 = vmatpush1.msra.mxu0 0.0
    %186 = vmatprep.subr.mxu0 0.0
    %187 = vmatpush1.msra.mxu0 0.0
    %188 = vmatprep.subr.mxu0 0.0
    %189 = vmatpush1.msra.mxu0 0.0
    %190 = vmatprep.subr.mxu0 0.0
    %191 = vmatpush1.msra.mxu0 0.0
    %192 = vmatprep.subr.mxu0 0.0
    %193 = vmatpush1.msra.mxu0 0.0
    %194 = vmatprep.subr.mxu0 0.0
    %195 = vmatpush1.msra.mxu0 0.0
    %196 = vmatprep.subr.mxu0 0.0
    %197 = vmatpush1.msra.mxu0 0.0
    %198 = vmatprep.subr.mxu0 0.0
    %199 = vmatpush1.msra.mxu0 0.0
    %200 = vmatprep.subr.mxu0 0.0
    %201 = vmatpush1.msra.mxu0 0.0
    %202 = vmatprep.subr.mxu0 0.0
    %203 = vmatpush1.msra.mxu0 0.0
    %204 = vmatprep.subr.mxu0 0.0
    %205 = vmatpush1.msra.mxu0 0.0
    %206 = vmatprep.subr.mxu0 0.0
    %207 = vmatpush1.msra.mxu0 0.0
    %208 = vmatprep.subr.mxu0 0.0
    %209 = vmatpush1.msra.mxu0 0.0
    %210 = vmatprep.subr.mxu0 0.0
    %211 = vmatpush1.msra.mxu0 0.0
    %212 = vmatprep.subr.mxu0 0.0
    %213 = vmatpush1.msra.mxu0 0.0
    %214 = vmatprep.subr.mxu0 0.0
    %215 = vmatpush1.msra.mxu0 0.0
    %216 = vmatprep.subr.mxu0 0.0
    %217 = vmatpush1.msra.mxu0 0.0
    %218 = vmatprep.subr.mxu0 0.0
    %219 = vmatpush1.msra.mxu0 0.0
    %220 = vmatprep.subr.mxu0 0.0
    %221 = vmatpush1.msra.mxu0 0.0
    %222 = vmatprep.subr.mxu0 0.0
    %223 = vmatpush1.msra.mxu0 0.0
    %224 = vmatprep.subr.mxu0 0.0
    %225 = vmatpush1.msra.mxu0 0.0
    %226 = vmatprep.mubr.f32.mxu0 0.0
    %227 = vmatmul.mubr.f32.gmra.mrb[0].mxu0 %v63
    %v228 = vpop.f32.mrb[0].mxu0
    %v229 = vadd.f32 %v59, %v228
    %v230 = vpop.f32.mrb[0].mxu0
    %231 = vmatprep.mubr.f32.mxu0 0.0
    %232 = vmatmul.mubr.f32.gmra.mrb[0].mxu0 %v66
    %v233 = vpop.f32.mrb[0].mxu0
    %v234 = vadd.f32 %v59, %v233
    %v235 = vpop.f32.mrb[0].mxu0
    %236 = vmatprep.mubr.f32.mxu0 0.0
    %237 = vmatmul.mubr.f32.gmra.mrb[0].mxu0 %v69
    %v238 = vpop.f32.mrb[0].mxu0
    %v239 = vadd.f32 %v59, %v238
    %v240 = vpop.f32.mrb[0].mxu0
    %241 = vmatprep.mubr.f32.mxu0 0.0
    %242 = vmatmul.mubr.f32.gmra.mrb[0].mxu0 %v72
    %v243 = vpop.f32.mrb[0].mxu0
    %v244 = vadd.f32 %v59, %v243
    %v245 = vpop.f32.mrb[0].mxu0
    %246 = vmatprep.mubr.f32.mxu0 0.0
    %247 = vmatmul.mubr.f32.gmra.mrb[0].mxu0 %v75
    %v248 = vpop.f32.mrb[0].mxu0
    %v249 = vadd.f32 %v59, %v248
    %v250 = vpop.f32.mrb[0].mxu0
    %251 = vmatprep.mubr.f32.mxu0 0.0
    %252 = vmatmul.mubr.f32.gmra.mrb[0].mxu0 %v78
    %v253 = vpop.f32.mrb[0].mxu0
    %v254 = vadd.f32 %v59, %v253
    %v255 = vpop.f32.mrb[0].mxu0
    %256 = vmatprep.mubr.f32.mxu0 0.0
    %257 = vmatmul.mubr.f32.gmra.mrb[0].mxu0 %v81
    %v258 = vpop.f32.mrb[0].mxu0
    %v259 = vadd.f32 %v59, %v258
    %v260 = vpop.f32.mrb[0].mxu0
    %261 = vmatprep.mubr.f32.mxu0 0.0
    %262 = vmatmul.mubr.f32.gmra.mrb[0].mxu0 %v84
    %v263 = vpop.f32.mrb[0].mxu0
    %v264 = vadd.f32 %v59, %v263
    %v265 = vpop.f32.mrb[0].mxu0
    %266 = vmatprep.mubr.f32.mxu0 0.0
    %267 = vmatmul.mubr.f32.gmra.mrb[0].mxu0 %v87
    %v268 = vpop.f32.mrb[0].mxu0
    %v269 = vadd.f32 %v59, %v268
    %v270 = vpop.f32.mrb[0].mxu0
    %271 = vmatprep.mubr.f32.mxu0 0.0
    %272 = vmatmul.mubr.f32.gmra.mrb[0].mxu0 %v90
    %v273 = vpop.f32.mrb[0].mxu0
    %v274 = vadd.f32 %v59, %v273
    %v275 = vpop.f32.mrb[0].mxu0
    %276 = vmatprep.mubr.f32.mxu0 0.0
    %277 = vmatmul.mubr.f32.gmra.mrb[0].mxu0 %v93
    %v278 = vpop.f32.mrb[0].mxu0
    %v279 = vadd.f32 %v59, %v278
    %v280 = vpop.f32.mrb[0].mxu0
    %281 = vmatprep.mubr.f32.mxu0 0.0
    %282 = vmatmul.mubr.f32.gmra.mrb[0].mxu0 %v96
    %v283 = vpop.f32.mrb[0].mxu0
    %v284 = vadd.f32 %v59, %v283
    %v285 = vpop.f32.mrb[0].mxu0
    %286 = vmatprep.mubr.f32.mxu0 0.0
    %287 = vmatmul.mubr.f32.gmra.mrb[0].mxu0 %v99
    %v288 = vpop.f32.mrb[0].mxu0
    %v289 = vadd.f32 %v59, %v288
    %v290 = vpop.f32.mrb[0].mxu0
    %291 = vmatprep.mubr.f32.mxu0 0.0
    %292 = vmatmul.mubr.f32.gmra.mrb[0].mxu0 %v102
    %v293 = vpop.f32.mrb[0].mxu0
    %v294 = vadd.f32 %v59, %v293
    %v295 = vpop.f32.mrb[0].mxu0
    %296 = vmatprep.mubr.f32.mxu0 0.0
    %297 = vmatmul.mubr.f32.gmra.mrb[0].mxu0 %v105
    %v298 = vpop.f32.mrb[0].mxu0
    %v299 = vadd.f32 %v59, %v298
    %v300 = vpop.f32.mrb[0].mxu0
    %301 = vmatprep.mubr.f32.mxu0 0.0
    %302 = vmatmul.mubr.f32.gmra.mrb[0].mxu0 %v108
    %v303 = vpop.f32.mrb[0].mxu0
    %v304 = vadd.f32 %v59, %v303
    %v305 = vpop.f32.mrb[0].mxu0
    %306 = vmatprep.mubr.f32.mxu0 0.0
    %307 = vmatmul.mubr.f32.gmra.mrb[0].mxu0 %v111
    %v308 = vpop.f32.mrb[0].mxu0
    %v309 = vadd.f32 %v59, %v308
    %v310 = vpop.f32.mrb[0].mxu0
    %311 = vmatprep.mubr.f32.mxu0 0.0
    %312 = vmatmul.mubr.f32.gmra.mrb[0].mxu0 %v114
    %v313 = vpop.f32.mrb[0].mxu0
    %v314 = vadd.f32 %v59, %v313
    %v315 = vpop.f32.mrb[0].mxu0
    %316 = vmatprep.mubr.f32.mxu0 0.0
    %317 = vmatmul.mubr.f32.gmra.mrb[0].mxu0 %v117
    %v318 = vpop.f32.mrb[0].mxu0
    %v319 = vadd.f32 %v59, %v318
    %v320 = vpop.f32.mrb[0].mxu0
    %321 = vmatprep.mubr.f32.mxu0 0.0
    %322 = vmatmul.mubr.f32.gmra.mrb[0].mxu0 %v120
    %v323 = vpop.f32.mrb[0].mxu0
    %v324 = vadd.f32 %v59, %v323
    %v325 = vpop.f32.mrb[0].mxu0
    %326 = vmatprep.mubr.f32.mxu0 0.0
    %327 = vmatmul.mubr.f32.gmra.mrb[0].mxu0 %v123
    %v328 = vpop.f32.mrb[0].mxu0
    %v329 = vadd.f32 %v59, %v328
    %v330 = vpop.f32.mrb[0].mxu0
    %331 = vmatprep.mubr.f32.mxu0 0.0
    %332 = vmatmul.mubr.f32.gmra.mrb[0].mxu0 %v126
    %v333 = vpop.f32.mrb[0].mxu0
    %v334 = vadd.f32 %v59, %v333
    %v335 = vpop.f32.mrb[0].mxu0
    %336 = vmatprep.mubr.f32.mxu0 0.0
    %337 = vmatmul.mubr.f32.gmra.mrb[0].mxu0 %v129
    %v338 = vpop.f32.mrb[0].mxu0
    %v339 = vadd.f32 %v59, %v338
    %v340 = vpop.f32.mrb[0].mxu0
    %341 = vmatprep.mubr.f32.mxu0 0.0
    %342 = vmatmul.mubr.f32.gmra.mrb[0].mxu0 %v132
    %v343 = vpop.f32.mrb[0].mxu0
    %v344 = vadd.f32 %v59, %v343
    %v345 = vpop.f32.mrb[0].mxu0
    %346 = vmatprep.mubr.f32.mxu0 0.0
    %347 = vmatmul.mubr.f32.gmra.mrb[0].mxu0 %v135
    %v348 = vpop.f32.mrb[0].mxu0
    %v349 = vadd.f32 %v59, %v348
    %v350 = vpop.f32.mrb[0].mxu0
    %351 = vmatprep.mubr.f32.mxu0 0.0
    %352 = vmatmul.mubr.f32.gmra.mrb[0].mxu0 %v138
    %v353 = vpop.f32.mrb[0].mxu0
    %v354 = vadd.f32 %v59, %v353
    %v355 = vpop.f32.mrb[0].mxu0
    %356 = vmatprep.mubr.f32.mxu0 0.0
    %357 = vmatmul.mubr.f32.gmra.mrb[0].mxu0 %v141
    %v358 = vpop.f32.mrb[0].mxu0
    %v359 = vadd.f32 %v59, %v358
    %v360 = vpop.f32.mrb[0].mxu0
    %361 = vmatprep.mubr.f32.mxu0 0.0
    %362 = vmatmul.mubr.f32.gmra.mrb[0].mxu0 %v144
    %v363 = vpop.f32.mrb[0].mxu0
    %v364 = vadd.f32 %v59, %v363
    %v365 = vpop.f32.mrb[0].mxu0
    %366 = vmatprep.mubr.f32.mxu0 0.0
    %367 = vmatmul.mubr.f32.gmra.mrb[0].mxu0 %v147
    %v368 = vpop.f32.mrb[0].mxu0
    %v369 = vadd.f32 %v59, %v368
    %v370 = vpop.f32.mrb[0].mxu0
    %371 = vmatprep.mubr.f32.mxu0 0.0
    %372 = vmatmul.mubr.f32.gmra.mrb[0].mxu0 %v150
    %v373 = vpop.f32.mrb[0].mxu0
    %v374 = vadd.f32 %v59, %v373
    %v375 = vpop.f32.mrb[0].mxu0
    %376 = vmatprep.mubr.f32.mxu0 0.0
    %377 = vmatmul.mubr.f32.gmra.mrb[0].mxu0 %v153
    %v378 = vpop.f32.mrb[0].mxu0
    %v379 = vadd.f32 %v59, %v378
    %v380 = vpop.f32.mrb[0].mxu0
    %381 = vmatprep.mubr.f32.mxu0 0.0
    %382 = vmatmul.mubr.f32.gmra.mrb[0].mxu0 %v156
    %v383 = vpop.f32.mrb[0].mxu0
    %v384 = vadd.f32 %v59, %v383
    %v385 = vpop.f32.mrb[0].mxu0
    %386 = vdwg.mxu0
    %v387 = vmax.f32 %v229, 0.0
    %v388 = vmax.f32 %v234, 0.0
    %v389 = vmax.f32 %v239, 0.0
    %v390 = vmax.f32 %v244, 0.0
    %v391 = vmax.f32 %v249, 0.0
    %v392 = vmax.f32 %v254, 0.0
    %v393 = vmax.f32 %v259, 0.0
    %v394 = vmax.f32 %v264, 0.0
    %v395 = vmax.f32 %v269, 0.0
    %v396 = vmax.f32 %v274, 0.0
    %v397 = vmax.f32 %v279, 0.0
    %v398 = vmax.f32 %v284, 0.0
    %v399 = vmax.f32 %v289, 0.0
    %v400 = vmax.f32 %v294, 0.0
    %v401 = vmax.f32 %v299, 0.0
    %v402 = vmax.f32 %v304, 0.0
    %v403 = vmax.f32 %v309, 0.0
    %v404 = vmax.f32 %v314, 0.0
    %v405 = vmax.f32 %v319, 0.0
    %v406 = vmax.f32 %v324, 0.0
    %v407 = vmax.f32 %v329, 0.0
    %v408 = vmax.f32 %v334, 0.0
    %v409 = vmax.f32 %v339, 0.0
    %v410 = vmax.f32 %v344, 0.0
    %v411 = vmax.f32 %v349, 0.0
    %v412 = vmax.f32 %v354, 0.0
    %v413 = vmax.f32 %v359, 0.0
    %v414 = vmax.f32 %v364, 0.0
    %v415 = vmax.f32 %v369, 0.0
    %v416 = vmax.f32 %v374, 0.0
    %v417 = vmax.f32 %v379, 0.0
    %v418 = vmax.f32 %v384, 0.0
    %v419 = vld [vmem:[%s3] sm:$0xff]
    %v420 = vld [vmem:[%s3 + $0x8] sm:$0xff]
    %v421 = vld [vmem:[%s3 + $0x10] sm:$0xff]
    %v422 = vld [vmem:[%s3 + $0x18] sm:$0xff]
    %v423 = vld [vmem:[%s3 + $0x20] sm:$0xff]
    %v424 = vld [vmem:[%s3 + $0x28] sm:$0xff]
    %v425 = vld [vmem:[%s3 + $0x30] sm:$0xff]
    %v426 = vld [vmem:[%s3 + $0x38] sm:$0xff]
    %v427 = vld [vmem:[%s3 + $0x40] sm:$0xff]
    %v428 = vld [vmem:[%s3 + $0x48] sm:$0xff]
    %v429 = vld [vmem:[%s3 + $0x50] sm:$0xff]
    %v430 = vld [vmem:[%s3 + $0x58] sm:$0xff]
    %v431 = vld [vmem:[%s3 + $0x60] sm:$0xff]
    %v432 = vld [vmem:[%s3 + $0x68] sm:$0xff]
    %v433 = vld [vmem:[%s3 + $0x70] sm:$0xff]
    %v434 = vld [vmem:[%s3 + $0x78] sm:$0xff]
    %v435 = vld [vmem:[%s4] sm:$0x1]
    %v437 = vlaneseq
    %v438 = vshrl.u32 %v437, 7
    %v439 = vsub.s32 0, %v438
    %v440 = vrot.slane %v435, %v439
    %442 = vmatprep.subr.mxu0 0.0
    %443 = vmatpush1.msra.mxu0 %v419
    %444 = vmatprep.subr.mxu0 0.0
    %445 = vmatpush1.msra.mxu0 %v420
    %446 = vmatprep.subr.mxu0 0.0
    %447 = vmatpush1.msra.mxu0 %v421
    %448 = vmatprep.subr.mxu0 0.0
    %449 = vmatpush1.msra.mxu0 %v422
    %450 = vmatprep.subr.mxu0 0.0
    %451 = vmatpush1.msra.mxu0 %v423
    %452 = vmatprep.subr.mxu0 0.0
    %453 = vmatpush1.msra.mxu0 %v424
    %454 = vmatprep.subr.mxu0 0.0
    %455 = vmatpush1.msra.mxu0 %v425
    %456 = vmatprep.subr.mxu0 0.0
    %457 = vmatpush1.msra.mxu0 %v426
    %458 = vmatprep.subr.mxu0 0.0
    %459 = vmatpush1.msra.mxu0 %v427
    %460 = vmatprep.subr.mxu0 0.0
    %461 = vmatpush1.msra.mxu0 %v428
    %462 = vmatprep.subr.mxu0 0.0
    %463 = vmatpush1.msra.mxu0 %v429
    %464 = vmatprep.subr.mxu0 0.0
    %465 = vmatpush1.msra.mxu0 %v430
    %466 = vmatprep.subr.mxu0 0.0
    %467 = vmatpush1.msra.mxu0 %v431
    %468 = vmatprep.subr.mxu0 0.0
    %469 = vmatpush1.msra.mxu0 %v432
    %470 = vmatprep.subr.mxu0 0.0
    %471 = vmatpush1.msra.mxu0 %v433
    %472 = vmatprep.subr.mxu0 0.0
    %473 = vmatpush1.msra.mxu0 %v434
    %474 = vmatprep.subr.mxu0 0.0
    %475 = vmatpush1.msra.mxu0 0.0
    %476 = vmatprep.subr.mxu0 0.0
    %477 = vmatpush1.msra.mxu0 0.0
    %478 = vmatprep.subr.mxu0 0.0
    %479 = vmatpush1.msra.mxu0 0.0
    %480 = vmatprep.subr.mxu0 0.0
    %481 = vmatpush1.msra.mxu0 0.0
    %482 = vmatprep.subr.mxu0 0.0
    %483 = vmatpush1.msra.mxu0 0.0
    %484 = vmatprep.subr.mxu0 0.0
    %485 = vmatpush1.msra.mxu0 0.0
    %486 = vmatprep.subr.mxu0 0.0
    %487 = vmatpush1.msra.mxu0 0.0
    %488 = vmatprep.subr.mxu0 0.0
    %489 = vmatpush1.msra.mxu0 0.0
    %490 = vmatprep.subr.mxu0 0.0
    %491 = vmatpush1.msra.mxu0 0.0
    %492 = vmatprep.subr.mxu0 0.0
    %493 = vmatpush1.msra.mxu0 0.0
    %494 = vmatprep.subr.mxu0 0.0
    %495 = vmatpush1.msra.mxu0 0.0
    %496 = vmatprep.subr.mxu0 0.0
    %497 = vmatpush1.msra.mxu0 0.0
    %498 = vmatprep.subr.mxu0 0.0
    %499 = vmatpush1.msra.mxu0 0.0
    %500 = vmatprep.subr.mxu0 0.0
    %501 = vmatpush1.msra.mxu0 0.0
    %502 = vmatprep.subr.mxu0 0.0
    %503 = vmatpush1.msra.mxu0 0.0
    %504 = vmatprep.subr.mxu0 0.0
    %505 = vmatpush1.msra.mxu0 0.0
    %506 = vmatprep.mubr.f32.mxu0 0.0
    %507 = vmatmul.mubr.f32.gmra.mrb[0].mxu0 %v387
    %v508 = vpop.f32.mrb[0].mxu0
    %v509 = vadd.f32 %v440, %v508
    %v510 = vpop.f32.mrb[0].mxu0
    %511 = vmatprep.mubr.f32.mxu0 0.0
    %512 = vmatmul.mubr.f32.gmra.mrb[0].mxu0 %v388
    %v513 = vpop.f32.mrb[0].mxu0
    %v514 = vadd.f32 %v440, %v513
    %v515 = vpop.f32.mrb[0].mxu0
    %516 = vmatprep.mubr.f32.mxu0 0.0
    %517 = vmatmul.mubr.f32.gmra.mrb[0].mxu0 %v389
    %v518 = vpop.f32.mrb[0].mxu0
    %v519 = vadd.f32 %v440, %v518
    %v520 = vpop.f32.mrb[0].mxu0
    %521 = vmatprep.mubr.f32.mxu0 0.0
    %522 = vmatmul.mubr.f32.gmra.mrb[0].mxu0 %v390
    %v523 = vpop.f32.mrb[0].mxu0
    %v524 = vadd.f32 %v440, %v523
    %v525 = vpop.f32.mrb[0].mxu0
    %526 = vmatprep.mubr.f32.mxu0 0.0
    %527 = vmatmul.mubr.f32.gmra.mrb[0].mxu0 %v391
    %v528 = vpop.f32.mrb[0].mxu0
    %v529 = vadd.f32 %v440, %v528
    %v530 = vpop.f32.mrb[0].mxu0
    %531 = vmatprep.mubr.f32.mxu0 0.0
    %532 = vmatmul.mubr.f32.gmra.mrb[0].mxu0 %v392
    %v533 = vpop.f32.mrb[0].mxu0
    %v534 = vadd.f32 %v440, %v533
    %v535 = vpop.f32.mrb[0].mxu0
    %536 = vmatprep.mubr.f32.mxu0 0.0
    %537 = vmatmul.mubr.f32.gmra.mrb[0].mxu0 %v393
    %v538 = vpop.f32.mrb[0].mxu0
    %v539 = vadd.f32 %v440, %v538
    %v540 = vpop.f32.mrb[0].mxu0
    %541 = vmatprep.mubr.f32.mxu0 0.0
    %542 = vmatmul.mubr.f32.gmra.mrb[0].mxu0 %v394
    %v543 = vpop.f32.mrb[0].mxu0
    %v544 = vadd.f32 %v440, %v543
    %v545 = vpop.f32.mrb[0].mxu0
    %546 = vmatprep.mubr.f32.mxu0 0.0
    %547 = vmatmul.mubr.f32.gmra.mrb[0].mxu0 %v395
    %v548 = vpop.f32.mrb[0].mxu0
    %v549 = vadd.f32 %v440, %v548
    %v550 = vpop.f32.mrb[0].mxu0
    %551 = vmatprep.mubr.f32.mxu0 0.0
    %552 = vmatmul.mubr.f32.gmra.mrb[0].mxu0 %v396
    %v553 = vpop.f32.mrb[0].mxu0
    %v554 = vadd.f32 %v440, %v553
    %v555 = vpop.f32.mrb[0].mxu0
    %556 = vmatprep.mubr.f32.mxu0 0.0
    %557 = vmatmul.mubr.f32.gmra.mrb[0].mxu0 %v397
    %v558 = vpop.f32.mrb[0].mxu0
    %v559 = vadd.f32 %v440, %v558
    %v560 = vpop.f32.mrb[0].mxu0
    %561 = vmatprep.mubr.f32.mxu0 0.0
    %562 = vmatmul.mubr.f32.gmra.mrb[0].mxu0 %v398
    %v563 = vpop.f32.mrb[0].mxu0
    %v564 = vadd.f32 %v440, %v563
    %v565 = vpop.f32.mrb[0].mxu0
    %566 = vmatprep.mubr.f32.mxu0 0.0
    %567 = vmatmul.mubr.f32.gmra.mrb[0].mxu0 %v399
    %v568 = vpop.f32.mrb[0].mxu0
    %v569 = vadd.f32 %v440, %v568
    %v570 = vpop.f32.mrb[0].mxu0
    %571 = vmatprep.mubr.f32.mxu0 0.0
    %572 = vmatmul.mubr.f32.gmra.mrb[0].mxu0 %v400
    %v573 = vpop.f32.mrb[0].mxu0
    %v574 = vadd.f32 %v440, %v573
    %v575 = vpop.f32.mrb[0].mxu0
    %576 = vmatprep.mubr.f32.mxu0 0.0
    %577 = vmatmul.mubr.f32.gmra.mrb[0].mxu0 %v401
    %v578 = vpop.f32.mrb[0].mxu0
    %v579 = vadd.f32 %v440, %v578
    %v580 = vpop.f32.mrb[0].mxu0
    %581 = vmatprep.mubr.f32.mxu0 0.0
    %582 = vmatmul.mubr.f32.gmra.mrb[0].mxu0 %v402
    %v583 = vpop.f32.mrb[0].mxu0
    %v584 = vadd.f32 %v440, %v583
    %v585 = vpop.f32.mrb[0].mxu0
    %586 = vmatprep.mubr.f32.mxu0 0.0
    %587 = vmatmul.mubr.f32.gmra.mrb[0].mxu0 %v403
    %v588 = vpop.f32.mrb[0].mxu0
    %v589 = vadd.f32 %v440, %v588
    %v590 = vpop.f32.mrb[0].mxu0
    %591 = vmatprep.mubr.f32.mxu0 0.0
    %592 = vmatmul.mubr.f32.gmra.mrb[0].mxu0 %v404
    %v593 = vpop.f32.mrb[0].mxu0
    %v594 = vadd.f32 %v440, %v593
    %v595 = vpop.f32.mrb[0].mxu0
    %596 = vmatprep.mubr.f32.mxu0 0.0
    %597 = vmatmul.mubr.f32.gmra.mrb[0].mxu0 %v405
    %v598 = vpop.f32.mrb[0].mxu0
    %v599 = vadd.f32 %v440, %v598
    %v600 = vpop.f32.mrb[0].mxu0
    %601 = vmatprep.mubr.f32.mxu0 0.0
    %602 = vmatmul.mubr.f32.gmra.mrb[0].mxu0 %v406
    %v603 = vpop.f32.mrb[0].mxu0
    %v604 = vadd.f32 %v440, %v603
    %v605 = vpop.f32.mrb[0].mxu0
    %606 = vmatprep.mubr.f32.mxu0 0.0
    %607 = vmatmul.mubr.f32.gmra.mrb[0].mxu0 %v407
    %v608 = vpop.f32.mrb[0].mxu0
    %v609 = vadd.f32 %v440, %v608
    %v610 = vpop.f32.mrb[0].mxu0
    %611 = vmatprep.mubr.f32.mxu0 0.0
    %612 = vmatmul.mubr.f32.gmra.mrb[0].mxu0 %v408
    %v613 = vpop.f32.mrb[0].mxu0
    %v614 = vadd.f32 %v440, %v613
    %v615 = vpop.f32.mrb[0].mxu0
    %616 = vmatprep.mubr.f32.mxu0 0.0
    %617 = vmatmul.mubr.f32.gmra.mrb[0].mxu0 %v409
    %v618 = vpop.f32.mrb[0].mxu0
    %v619 = vadd.f32 %v440, %v618
    %v620 = vpop.f32.mrb[0].mxu0
    %621 = vmatprep.mubr.f32.mxu0 0.0
    %622 = vmatmul.mubr.f32.gmra.mrb[0].mxu0 %v410
    %v623 = vpop.f32.mrb[0].mxu0
    %v624 = vadd.f32 %v440, %v623
    %v625 = vpop.f32.mrb[0].mxu0
    %626 = vmatprep.mubr.f32.mxu0 0.0
    %627 = vmatmul.mubr.f32.gmra.mrb[0].mxu0 %v411
    %v628 = vpop.f32.mrb[0].mxu0
    %v629 = vadd.f32 %v440, %v628
    %v630 = vpop.f32.mrb[0].mxu0
    %631 = vmatprep.mubr.f32.mxu0 0.0
    %632 = vmatmul.mubr.f32.gmra.mrb[0].mxu0 %v412
    %v633 = vpop.f32.mrb[0].mxu0
    %v634 = vadd.f32 %v440, %v633
    %v635 = vpop.f32.mrb[0].mxu0
    %636 = vmatprep.mubr.f32.mxu0 0.0
    %637 = vmatmul.mubr.f32.gmra.mrb[0].mxu0 %v413
    %v638 = vpop.f32.mrb[0].mxu0
    %v639 = vadd.f32 %v440, %v638
    %v640 = vpop.f32.mrb[0].mxu0
    %641 = vmatprep.mubr.f32.mxu0 0.0
    %642 = vmatmul.mubr.f32.gmra.mrb[0].mxu0 %v414
    %v643 = vpop.f32.mrb[0].mxu0
    %v644 = vadd.f32 %v440, %v643
    %v645 = vpop.f32.mrb[0].mxu0
    %646 = vmatprep.mubr.f32.mxu0 0.0
    %647 = vmatmul.mubr.f32.gmra.mrb[0].mxu0 %v415
    %v648 = vpop.f32.mrb[0].mxu0
    %v649 = vadd.f32 %v440, %v648
    %v650 = vpop.f32.mrb[0].mxu0
    %651 = vmatprep.mubr.f32.mxu0 0.0
    %652 = vmatmul.mubr.f32.gmra.mrb[0].mxu0 %v416
    %v653 = vpop.f32.mrb[0].mxu0
    %v654 = vadd.f32 %v440, %v653
    %v655 = vpop.f32.mrb[0].mxu0
    %656 = vmatprep.mubr.f32.mxu0 0.0
    %657 = vmatmul.mubr.f32.gmra.mrb[0].mxu0 %v417
    %v658 = vpop.f32.mrb[0].mxu0
    %v659 = vadd.f32 %v440, %v658
    %v660 = vpop.f32.mrb[0].mxu0
    %661 = vmatprep.mubr.f32.mxu0 0.0
    %662 = vmatmul.mubr.f32.gmra.mrb[0].mxu0 %v418
    %v663 = vpop.f32.mrb[0].mxu0
    %v664 = vadd.f32 %v440, %v663
    %v665 = vpop.f32.mrb[0].mxu0
    %666 = vdwg.mxu0
    %667 = vst [vmem:[#allocation2] sm:$0xff] %v509
    %668 = vst [vmem:[#allocation2 + $0x8] sm:$0xff] %v514
    %669 = vst [vmem:[#allocation2 + $0x10] sm:$0xff] %v519
    %670 = vst [vmem:[#allocation2 + $0x18] sm:$0xff] %v524
    %671 = vst [vmem:[#allocation2 + $0x20] sm:$0xff] %v529
    %672 = vst [vmem:[#allocation2 + $0x28] sm:$0xff] %v534
    %673 = vst [vmem:[#allocation2 + $0x30] sm:$0xff] %v539
    %674 = vst [vmem:[#allocation2 + $0x38] sm:$0xff] %v544
    %675 = vst [vmem:[#allocation2 + $0x40] sm:$0xff] %v549
    %676 = vst [vmem:[#allocation2 + $0x48] sm:$0xff] %v554
    %677 = vst [vmem:[#allocation2 + $0x50] sm:$0xff] %v559
    %678 = vst [vmem:[#allocation2 + $0x58] sm:$0xff] %v564
    %679 = vst [vmem:[#allocation2 + $0x60] sm:$0xff] %v569
    %680 = vst [vmem:[#allocation2 + $0x68] sm:$0xff] %v574
    %681 = vst [vmem:[#allocation2 + $0x70] sm:$0xff] %v579
    %682 = vst [vmem:[#allocation2 + $0x78] sm:$0xff] %v584
    %683 = vst [vmem:[#allocation2 + $0x80] sm:$0xff] %v589
    %684 = vst [vmem:[#allocation2 + $0x88] sm:$0xff] %v594
    %685 = vst [vmem:[#allocation2 + $0x90] sm:$0xff] %v599
    %686 = vst [vmem:[#allocation2 + $0x98] sm:$0xff] %v604
    %687 = vst [vmem:[#allocation2 + $0xa0] sm:$0xff] %v609
    %688 = vst [vmem:[#allocation2 + $0xa8] sm:$0xff] %v614
    %689 = vst [vmem:[#allocation2 + $0xb0] sm:$0xff] %v619
    %690 = vst [vmem:[#allocation2 + $0xb8] sm:$0xff] %v624
    %691 = vst [vmem:[#allocation2 + $0xc0] sm:$0xff] %v629
    %692 = vst [vmem:[#allocation2 + $0xc8] sm:$0xff] %v634
    %693 = vst [vmem:[#allocation2 + $0xd0] sm:$0xff] %v639
    %694 = vst [vmem:[#allocation2 + $0xd8] sm:$0xff] %v644
    %695 = vst [vmem:[#allocation2 + $0xe0] sm:$0xff] %v649
    %696 = vst [vmem:[#allocation2 + $0xe8] sm:$0xff] %v654
    %697 = vst [vmem:[#allocation2 + $0xf0] sm:$0xff] %v659
    %698 = vst [vmem:[#allocation2 + $0xf8] sm:$0xff] %v664
    // Predicated region
    $region22: #{tpu_custom_call.1} parent=1 // pred_check
      _
    $region23: #{tpu_custom_call.1} parent=1 // pred_check_branch
      %700 = sbr.rel (0) target = $region25
    $region24: #{tpu_custom_call.1} parent=1 // pred_region
      %s702 = ssub.s32 4096, 4096
      %703 = vsyncadd [#allocation3], %s702
      %s704 = sshll.u32 [#allocation2], 4
      %s705 = int_to_ptr.vmem [resolvable:$true] %s704
      %710 = dma.vmem_to_hbm [thread:$0]  %s705, 4096, %s5, [#allocation3], 128, 128, 8
    $region25: #{tpu_custom_call.1} parent=1 // pred_fallthru
      _
    // Predicated region
    $region26: #{tpu_custom_call.1} parent=1 // pred_check
      _
    $region27: #{tpu_custom_call.1} parent=1 // pred_check_branch
      %712 = sbr.rel (0) target = $region29
    $region28: #{tpu_custom_call.1} parent=1 // pred_region
      %713 = dma.done [#allocation3], 4096
    $region29: #{tpu_custom_call.1} parent=1 // pred_fallthru
      _
    %714 = vsyncpa [#allocation3], 1

</llo_original>
